<compile_context>
chip_gen: v6e
topology: v6e:2x2x1
jax: 0.10.0
libtpu: 0.0.40
codegen_flags: <defaults>
</compile_context>

<pallas_src>
import functools

import jax
import jax.numpy as jnp
from jax.experimental import pallas as pl
from jax.experimental.pallas import tpu as pltpu


def _round_up(n, m):
    return ((n + m - 1) // m) * m


def _ffi_kernel(x_ref, w1wp_ref, w2_ref, wfc_ref, b_ref, out_ref,
                *, in_c_p, mid_p, h_dim_p):
    x = x_ref[...].astype(jnp.float32)                       # (tb, in_c_p)

    # Fused weight / bias views (all slice boundaries are multiples of 128).
    w1 = w1wp_ref[:, :mid_p]                                 # (in_c_p, mid_p)
    wp = w1wp_ref[:, mid_p:]                                 # (in_c_p, h_dim_p)
    b1 = b_ref[:, 0:mid_p]
    b2 = b_ref[:, mid_p:mid_p + in_c_p]
    bp = b_ref[:, mid_p + in_c_p:mid_p + in_c_p + h_dim_p]
    bfc = b_ref[:, mid_p + in_c_p + h_dim_p:]

    # linear1 + ReLU
    h = jnp.dot(x, w1, preferred_element_type=jnp.float32) + b1
    h = jnp.maximum(h, 0.0)

    # linear2 + residual
    y = jnp.dot(h, w2_ref[...], preferred_element_type=jnp.float32) + b2 + x

    # proj -> feat
    feat = jnp.dot(y, wp, preferred_element_type=jnp.float32) + bp

    # fc -> logits
    logits = jnp.dot(feat, wfc_ref[...], preferred_element_type=jnp.float32) + bfc

    # Single lane-dense packed output: [feat_padded | logits_padded].
    out_ref[...] = jnp.concatenate([feat, logits], axis=1).astype(out_ref.dtype)


def forgery_feature_identity(x, params, *, batch_tile=None, max_batch_tile=512):
    """x: [B, in_c] float32.  params: PyTorch-layout (out,in) weights + biases."""
    B, in_c = x.shape
    mid = params["w1"].shape[0]          # in_c // 2
    h_dim = params["wp"].shape[0]
    num_classes = params["wfc"].shape[0]

    # Lane-pad every feature dim to a multiple of 128.
    in_c_p = _round_up(in_c, 128)
    mid_p = _round_up(mid, 128)
    h_dim_p = _round_up(h_dim, 128)
    nc_p = _round_up(num_classes, 128)

    # Batch tiling: one big tile (whole batch) when it fits, else 512-row tiles.
    if batch_tile is None:
        batch_tile = min(_round_up(B, 8), max_batch_tile)
    tb = batch_tile
    B_p = _round_up(B, tb)

    # ---- wrapper-side layout plumbing (zero padding is exact) ----
    x_p = jnp.zeros((B_p, in_c_p), x.dtype).at[:B, :in_c].set(x)

    def pad_w(w, rows, cols):
        wt = w.T  # (in, out)
        return jnp.zeros((rows, cols), wt.dtype).at[:wt.shape[0], :wt.shape[1]].set(wt)

    def pad_b(b, n):
        return jnp.zeros((1, n), b.dtype).at[0, :b.shape[0]].set(b)

    w1 = pad_w(params["w1"], in_c_p, mid_p)
    wp = pad_w(params["wp"], in_c_p, h_dim_p)
    w1wp = jnp.concatenate([w1, wp], axis=1)         # (in_c_p, mid_p + h_dim_p)
    w2 = pad_w(params["w2"], mid_p, in_c_p)
    wfc = pad_w(params["wfc"], h_dim_p, nc_p)
    biases = jnp.concatenate(
        [pad_b(params["b1"], mid_p), pad_b(params["b2"], in_c_p),
         pad_b(params["bp"], h_dim_p), pad_b(params["bfc"], nc_p)], axis=1)

    out_w = h_dim_p + nc_p
    grid = (B_p // tb,)

    def full(shape):
        # whole-array block, same block for every batch tile
        return pl.BlockSpec(shape, lambda i: tuple(0 for _ in shape))

    kernel = functools.partial(_ffi_kernel, in_c_p=in_c_p, mid_p=mid_p,
                               h_dim_p=h_dim_p)

    f = pl.pallas_call(
        kernel,
        out_shape=jax.ShapeDtypeStruct((B_p, out_w), x.dtype),
        grid_spec=pltpu.PrefetchScalarGridSpec(
            num_scalar_prefetch=0,
            grid=grid,
            in_specs=[
                pl.BlockSpec((tb, in_c_p), lambda i: (i, 0)),   # x tile
                full((in_c_p, mid_p + h_dim_p)),                # W1 || Wp
                full((mid_p, in_c_p)),                          # W2
                full((h_dim_p, nc_p)),                          # Wfc
                full((1, mid_p + in_c_p + h_dim_p + nc_p)),     # b1|b2|bp|bfc
            ],
            out_specs=pl.BlockSpec((tb, out_w), lambda i: (i, 0)),
        ),
        compiler_params=pltpu.CompilerParams(
            dimension_semantics=("parallel",)),
    )
    packed = f(x_p, w1wp, w2, wfc, biases)

    feat = packed[:B, :h_dim]
    logits = packed[:B, h_dim_p:h_dim_p + num_classes]
    return logits, feat


def _init_params(key, in_c, h_dim, num_classes):
    """Deterministic synthetic init, PyTorch nn.Linear layout: W (out,in), b (out,)."""
    ks = jax.random.split(key, 8)
    mid = in_c // 2

    def lin(kw, kb, out_c, in_dim):
        bound = 1.0 / (in_dim ** 0.5)
        w = jax.random.uniform(kw, (out_c, in_dim), jnp.float32, -bound, bound)
        b = jax.random.uniform(kb, (out_c,), jnp.float32, -bound, bound)
        return w, b

    w1, b1 = lin(ks[0], ks[1], mid, in_c)
    w2, b2 = lin(ks[2], ks[3], in_c, mid)
    wp, bp = lin(ks[4], ks[5], h_dim, in_c)
    wfc, bfc = lin(ks[6], ks[7], num_classes, h_dim)
    return dict(w1=w1, b1=b1, w2=w2, b2=b2, wp=wp, bp=bp, wfc=wfc, bfc=bfc)


def _reference(x, p):
    """Plain-JAX replica of the PyTorch forward, for correctness checking."""
    h = jnp.maximum(x @ p["w1"].T + p["b1"], 0.0)
    y = h @ p["w2"].T + p["b2"] + x
    feat = y @ p["wp"].T + p["bp"]
    logits = feat @ p["wfc"].T + p["bfc"]
    return logits, feat


if __name__ == "__main__":
    key = jax.random.PRNGKey(0)
    k_x, k_p = jax.random.split(key)

    B, in_c, h_dim, num_classes = 16, 32, 32, 2
    x = jax.random.normal(k_x, (B, in_c), dtype=jnp.float32)
    params = _init_params(k_p, in_c, h_dim, num_classes)

    logits, feat = forgery_feature_identity(x, params)
    jax.block_until_ready((logits, feat))

    ref_logits, ref_feat = _reference(x, params)
    assert logits.shape == (B, num_classes) and feat.shape == (B, h_dim)
    assert jnp.allclose(logits, ref_logits, atol=1e-4, rtol=1e-4)
    assert jnp.allclose(feat, ref_feat, atol=1e-4, rtol=1e-4)

    print("KERNEL_OK")
</pallas_src>

<mosaic_0001>
module attributes {stable_mosaic.version = 11 : i64} {
  func.func @_ffi_kernel(%arg0: i32, %arg1: memref<16x128xf32, #tpu.memory_space<vmem>>, %arg2: memref<128x256xf32, #tpu.memory_space<vmem>>, %arg3: memref<128x128xf32, #tpu.memory_space<vmem>>, %arg4: memref<128x128xf32, #tpu.memory_space<vmem>>, %arg5: memref<1x512xf32, #tpu.memory_space<vmem>>, %arg6: memref<16x256xf32, #tpu.memory_space<vmem>>) attributes {dimension_semantics = [#tpu.dimension_semantics<parallel>], iteration_bounds = array<i64: 1>, scalar_prefetch = 0 : i64, scratch_operands = 0 : i64, tpu.core_type = #tpu.core_type<tc>, window_params = [{transform_indices = @transform_0, window_bounds = array<i64: 16, 128>}, {pipeline_mode = #tpu.pipeline_mode<synchronous>, transform_indices = @transform_1, window_bounds = array<i64: 128, 256>}, {pipeline_mode = #tpu.pipeline_mode<synchronous>, transform_indices = @transform_2, window_bounds = array<i64: 128, 128>}, {pipeline_mode = #tpu.pipeline_mode<synchronous>, transform_indices = @transform_3, window_bounds = array<i64: 128, 128>}, {pipeline_mode = #tpu.pipeline_mode<synchronous>, transform_indices = @transform_4, window_bounds = array<i64: 1, 512>}, {transform_indices = @transform_5, window_bounds = array<i64: 16, 256>}]} {
    %c0 = arith.constant 0 : index
    %c0_0 = arith.constant 0 : index
    %0 = vector.load %arg1[%c0, %c0_0] : memref<16x128xf32, #tpu.memory_space<vmem>>, vector<16x128xf32>
    %c0_1 = arith.constant 0 : index
    %c0_2 = arith.constant 0 : index
    %1 = vector.load %arg2[%c0_1, %c0_2] : memref<128x256xf32, #tpu.memory_space<vmem>>, vector<128x128xf32>
    %c0_3 = arith.constant 0 : index
    %c128 = arith.constant 128 : index
    %2 = vector.load %arg2[%c0_3, %c128] : memref<128x256xf32, #tpu.memory_space<vmem>>, vector<128x128xf32>
    %c0_4 = arith.constant 0 : index
    %c0_5 = arith.constant 0 : index
    %3 = vector.load %arg5[%c0_4, %c0_5] : memref<1x512xf32, #tpu.memory_space<vmem>>, vector<1x128xf32>
    %c0_6 = arith.constant 0 : index
    %c128_7 = arith.constant 128 : index
    %4 = vector.load %arg5[%c0_6, %c128_7] : memref<1x512xf32, #tpu.memory_space<vmem>>, vector<1x128xf32>
    %c0_8 = arith.constant 0 : index
    %c256 = arith.constant 256 : index
    %5 = vector.load %arg5[%c0_8, %c256] : memref<1x512xf32, #tpu.memory_space<vmem>>, vector<1x128xf32>
    %c0_9 = arith.constant 0 : index
    %c384 = arith.constant 384 : index
    %6 = vector.load %arg5[%c0_9, %c384] : memref<1x512xf32, #tpu.memory_space<vmem>>, vector<1x128xf32>
    %cst = arith.constant dense<0.000000e+00> : vector<16x128xf32>
    %7 = tpu.matmul %0, %1, %cst {dimension_numbers = #tpu.dot_dimension_numbers<[1], [0], [0], [1], [0, 0, 1, 1], [], []>} : vector<16x128xf32>, vector<128x128xf32>, vector<16x128xf32> -> vector<16x128xf32>
    %8 = vector.broadcast %3 : vector<1x128xf32> to vector<16x128xf32>
    %9 = arith.addf %7, %8 : vector<16x128xf32>
    %cst_10 = arith.constant 0.000000e+00 : f32
    %10 = vector.broadcast %cst_10 : f32 to vector<16x128xf32>
    %11 = arith.maximumf %9, %10 : vector<16x128xf32>
    %c0_11 = arith.constant 0 : index
    %c0_12 = arith.constant 0 : index
    %12 = vector.load %arg3[%c0_11, %c0_12] : memref<128x128xf32, #tpu.memory_space<vmem>>, vector<128x128xf32>
    %cst_13 = arith.constant dense<0.000000e+00> : vector<16x128xf32>
    %13 = tpu.matmul %11, %12, %cst_13 {dimension_numbers = #tpu.dot_dimension_numbers<[1], [0], [0], [1], [0, 0, 1, 1], [], []>} : vector<16x128xf32>, vector<128x128xf32>, vector<16x128xf32> -> vector<16x128xf32>
    %14 = vector.broadcast %4 : vector<1x128xf32> to vector<16x128xf32>
    %15 = arith.addf %13, %14 : vector<16x128xf32>
    %16 = arith.addf %15, %0 : vector<16x128xf32>
    %cst_14 = arith.constant dense<0.000000e+00> : vector<16x128xf32>
    %17 = tpu.matmul %16, %2, %cst_14 {dimension_numbers = #tpu.dot_dimension_numbers<[1], [0], [0], [1], [0, 0, 1, 1], [], []>} : vector<16x128xf32>, vector<128x128xf32>, vector<16x128xf32> -> vector<16x128xf32>
    %18 = vector.broadcast %5 : vector<1x128xf32> to vector<16x128xf32>
    %19 = arith.addf %17, %18 : vector<16x128xf32>
    %c0_15 = arith.constant 0 : index
    %c0_16 = arith.constant 0 : index
    %20 = vector.load %arg4[%c0_15, %c0_16] : memref<128x128xf32, #tpu.memory_space<vmem>>, vector<128x128xf32>
    %cst_17 = arith.constant dense<0.000000e+00> : vector<16x128xf32>
    %21 = tpu.matmul %19, %20, %cst_17 {dimension_numbers = #tpu.dot_dimension_numbers<[1], [0], [0], [1], [0, 0, 1, 1], [], []>} : vector<16x128xf32>, vector<128x128xf32>, vector<16x128xf32> -> vector<16x128xf32>
    %22 = vector.broadcast %6 : vector<1x128xf32> to vector<16x128xf32>
    %23 = arith.addf %21, %22 : vector<16x128xf32>
    %24 = tpu.concatenate %19, %23 in 1 : vector<16x128xf32>, vector<16x128xf32> -> vector<16x256xf32>
    %c0_18 = arith.constant 0 : index
    %c0_19 = arith.constant 0 : index
    %25 = vector.load %arg6[%c0_18, %c0_19] : memref<16x256xf32, #tpu.memory_space<vmem>>, vector<16x256xf32>
    tpu.vector_store %arg6[%c0_18, %c0_19], %24 {strides = array<i32>} : memref<16x256xf32, #tpu.memory_space<vmem>>, vector<16x256xf32>,
    return
  }
  func.func @transform_0(%arg0: i32) -> (i32, i32) {
    %c0_i32 = arith.constant 0 : i32
    %c0_i32_0 = arith.constant 0 : i32
    return %arg0, %c0_i32 : i32, i32
  }
  func.func @transform_1(%arg0: i32) -> (i32, i32) {
    %c0_i32 = arith.constant 0 : i32
    %c0_i32_0 = arith.constant 0 : i32
    %c0_i32_1 = arith.constant 0 : i32
    return %c0_i32, %c0_i32_0 : i32, i32
  }
  func.func @transform_2(%arg0: i32) -> (i32, i32) {
    %c0_i32 = arith.constant 0 : i32
    %c0_i32_0 = arith.constant 0 : i32
    %c0_i32_1 = arith.constant 0 : i32
    return %c0_i32, %c0_i32_0 : i32, i32
  }
  func.func @transform_3(%arg0: i32) -> (i32, i32) {
    %c0_i32 = arith.constant 0 : i32
    %c0_i32_0 = arith.constant 0 : i32
    %c0_i32_1 = arith.constant 0 : i32
    return %c0_i32, %c0_i32_0 : i32, i32
  }
  func.func @transform_4(%arg0: i32) -> (i32, i32) {
    %c0_i32 = arith.constant 0 : i32
    %c0_i32_0 = arith.constant 0 : i32
    %c0_i32_1 = arith.constant 0 : i32
    return %c0_i32, %c0_i32_0 : i32, i32
  }
  func.func @transform_5(%arg0: i32) -> (i32, i32) {
    %c0_i32 = arith.constant 0 : i32
    %c0_i32_0 = arith.constant 0 : i32
    return %arg0, %c0_i32 : i32, i32
  }
}

</mosaic_0001>

<llo_original>
// kernel: tpu_custom_call.1
$region0: #{tpu_custom_call.1}
  #allocation0 [shape = 'u32[]', space=smem, size = 0x4, offset = 0x4, fixed_abs, tag = 'smem constant byte address 0x4 - core index']
  #allocation1 [shape = 'u32[144,128]{1,0:T(1,128)}', space=vmem, size = 0x12000, scoped, tag = 'internal scratch']
  %s0 = inlined_call_operand.hbm [shape: f32[16,128], index: 0, kind: input, shape index: {}]
  %s1 = inlined_call_operand.hbm [shape: f32[128,256], index: 1, kind: input, shape index: {}]
  %s2 = inlined_call_operand.hbm [shape: f32[128,128], index: 2, kind: input, shape index: {}]
  %s3 = inlined_call_operand.hbm [shape: f32[128,128], index: 3, kind: input, shape index: {}]
  %s4 = inlined_call_operand.vmem [shape: f32[1,512], index: 4, kind: input, shape index: {}]
  %s5 = inlined_call_operand.hbm [shape: f32[16,256], index: 5, kind: output, shape index: {}]
  %s6 = sld [smem:[#allocation0]]
  $region46: #{tpu_custom_call.1} parent=0
    _
  %s8 = ssub.s32 1, %s6
  %s9 = scalar_select 0, %s8, %s6
  $region1: #{tpu_custom_call.1} parent=0
    #allocation2 [shape = 'u8[8192]{0}', space=vmem, size = 0x2000, scoped, tag = 'input window, operand 0, single buffered']
    #allocation3 [shape = 's32[1]{0}', space=sflag, size = 0x4, scoped, tag = 'scoped memory for tpu_custom_call.1']
    #allocation4 [shape = 's32[1]{0}', space=sflag, size = 0x4, scoped, tag = 'scoped memory for tpu_custom_call.1']
    #allocation5 [shape = 'u8[131072]{0}', space=vmem, size = 0x20000, scoped, tag = 'input window, operand 1, single buffered']
    #allocation6 [shape = 's32[1]{0}', space=sflag, size = 0x4, scoped, tag = 'scoped memory for tpu_custom_call.1']
    #allocation7 [shape = 'u8[65536]{0}', space=vmem, size = 0x10000, scoped, tag = 'input window, operand 2, single buffered']
    #allocation8 [shape = 'u8[65536]{0}', space=vmem, size = 0x10000, scoped, tag = 'input window, operand 3, single buffered']
    #allocation9 [shape = 's32[1]{0}', space=sflag, size = 0x4, scoped, tag = 'scoped memory for tpu_custom_call.1']
    #allocation10 [shape = 'u8[16384]{0}', space=vmem, size = 0x4000, scoped, tag = 'output window, operand 0, single buffered']
    %10 = vsyncpa [#allocation3], 0
    %11 = vsyncpa [#allocation6], 0
    %12 = vsyncpa [#allocation9], 0
    %13 = vsyncpa [#allocation4], 0
    // Predicated region
    $region2: #{tpu_custom_call.1} parent=1 // pred_check
      _
    $region3: #{tpu_custom_call.1} parent=1 // pred_check_branch
      %15 = sbr.rel (0) target = $region5
    $region4: #{tpu_custom_call.1} parent=1 // pred_region
      %s17 = ssub.s32 256, 256
      %18 = vsyncadd [#allocation3], %s17
      %s19 = sshll.u32 [#allocation2], 4
      %s20 = int_to_ptr.vmem [resolvable:$true] %s19
      %25 = dma.hbm_to_vmem [thread:$0]  %s0, 256, %s20, [#allocation3], 128, 128, 8
    $region5: #{tpu_custom_call.1} parent=1 // pred_fallthru
      _
    // Predicated region
    $region6: #{tpu_custom_call.1} parent=1 // pred_check
      _
    $region7: #{tpu_custom_call.1} parent=1 // pred_check_branch
      %27 = sbr.rel (0) target = $region9
    $region8: #{tpu_custom_call.1} parent=1 // pred_region
      %s29 = ssub.s32 4096, 4096
      %30 = vsyncadd [#allocation6], %s29
      %s31 = sshll.u32 [#allocation5], 4
      %s32 = int_to_ptr.vmem [resolvable:$true] %s31
      %37 = dma.hbm_to_vmem [thread:$0]  %s1, 4096, %s32, [#allocation6], 256, 256, 16
    $region9: #{tpu_custom_call.1} parent=1 // pred_fallthru
      _
    // Predicated region
    $region10: #{tpu_custom_call.1} parent=1 // pred_check
      _
    $region11: #{tpu_custom_call.1} parent=1 // pred_check_branch
      %39 = sbr.rel (0) target = $region13
    $region12: #{tpu_custom_call.1} parent=1 // pred_region
      %s41 = ssub.s32 2048, 2048
      %42 = vsyncadd [#allocation6], %s41
      %s43 = sshll.u32 [#allocation7], 4
      %s44 = int_to_ptr.vmem [resolvable:$true] %s43
      %49 = dma.hbm_to_vmem [thread:$0]  %s2, 2048, %s44, [#allocation6], 128, 128, 8
    $region13: #{tpu_custom_call.1} parent=1 // pred_fallthru
      _
    // Predicated region
    $region14: #{tpu_custom_call.1} parent=1 // pred_check
      _
    $region15: #{tpu_custom_call.1} parent=1 // pred_check_branch
      %51 = sbr.rel (0) target = $region17
    $region16: #{tpu_custom_call.1} parent=1 // pred_region
      %s53 = ssub.s32 2048, 2048
      %54 = vsyncadd [#allocation9], %s53
      %s55 = sshll.u32 [#allocation8], 4
      %s56 = int_to_ptr.vmem [resolvable:$true] %s55
      %61 = dma.hbm_to_vmem [thread:$0]  %s3, 2048, %s56, [#allocation9], 128, 128, 8
    $region17: #{tpu_custom_call.1} parent=1 // pred_fallthru
      _
    // Predicated region
    $region18: #{tpu_custom_call.1} parent=1 // pred_check
      _
    $region19: #{tpu_custom_call.1} parent=1 // pred_check_branch
      %63 = sbr.rel (0) target = $region21
    $region20: #{tpu_custom_call.1} parent=1 // pred_region
      _
    $region21: #{tpu_custom_call.1} parent=1 // pred_fallthru
      _
    // Predicated region
    $region22: #{tpu_custom_call.1} parent=1 // pred_check
      _
    $region23: #{tpu_custom_call.1} parent=1 // pred_check_branch
      %65 = sbr.rel (0) target = $region25
    $region24: #{tpu_custom_call.1} parent=1 // pred_region
      %66 = dma.done [#allocation3], 256
    $region25: #{tpu_custom_call.1} parent=1 // pred_fallthru
      _
    // Predicated region
    $region26: #{tpu_custom_call.1} parent=1 // pred_check
      _
    $region27: #{tpu_custom_call.1} parent=1 // pred_check_branch
      %68 = sbr.rel (0) target = $region29
    $region28: #{tpu_custom_call.1} parent=1 // pred_region
      %69 = dma.done [#allocation6], 4096
    $region29: #{tpu_custom_call.1} parent=1 // pred_fallthru
      _
    // Predicated region
    $region30: #{tpu_custom_call.1} parent=1 // pred_check
      _
    $region31: #{tpu_custom_call.1} parent=1 // pred_check_branch
      %71 = sbr.rel (0) target = $region33
    $region32: #{tpu_custom_call.1} parent=1 // pred_region
      %72 = dma.done [#allocation6], 2048
    $region33: #{tpu_custom_call.1} parent=1 // pred_fallthru
      _
    // Predicated region
    $region34: #{tpu_custom_call.1} parent=1 // pred_check
      _
    $region35: #{tpu_custom_call.1} parent=1 // pred_check_branch
      %74 = sbr.rel (0) target = $region37
    $region36: #{tpu_custom_call.1} parent=1 // pred_region
      %75 = dma.done [#allocation9], 2048
    $region37: #{tpu_custom_call.1} parent=1 // pred_fallthru
      _
    %v76 = vld [vmem:[#allocation2] sm:$0xff]
    %v77 = vld [vmem:[#allocation2 + $0x8] sm:$0xff]
    %v78 = vld [vmem:[#allocation5] sm:$0xff]
    %v79 = vld [vmem:[#allocation5 + $0x10] sm:$0xff]
    %v80 = vld [vmem:[#allocation5 + $0x20] sm:$0xff]
    %v81 = vld [vmem:[#allocation5 + $0x30] sm:$0xff]
    %v82 = vld [vmem:[#allocation5 + $0x40] sm:$0xff]
    %v83 = vld [vmem:[#allocation5 + $0x50] sm:$0xff]
    %v84 = vld [vmem:[#allocation5 + $0x60] sm:$0xff]
    %v85 = vld [vmem:[#allocation5 + $0x70] sm:$0xff]
    %v86 = vld [vmem:[#allocation5 + $0x80] sm:$0xff]
    %v87 = vld [vmem:[#allocation5 + $0x90] sm:$0xff]
    %v88 = vld [vmem:[#allocation5 + $0xa0] sm:$0xff]
    %v89 = vld [vmem:[#allocation5 + $0xb0] sm:$0xff]
    %v90 = vld [vmem:[#allocation5 + $0xc0] sm:$0xff]
    %v91 = vld [vmem:[#allocation5 + $0xd0] sm:$0xff]
    %v92 = vld [vmem:[#allocation5 + $0xe0] sm:$0xff]
    %v93 = vld [vmem:[#allocation5 + $0xf0] sm:$0xff]
    %v94 = vld [vmem:[#allocation5 + $0x8] sm:$0xff]
    %v95 = vld [vmem:[#allocation5 + $0x18] sm:$0xff]
    %v96 = vld [vmem:[#allocation5 + $0x28] sm:$0xff]
    %v97 = vld [vmem:[#allocation5 + $0x38] sm:$0xff]
    %v98 = vld [vmem:[#allocation5 + $0x48] sm:$0xff]
    %v99 = vld [vmem:[#allocation5 + $0x58] sm:$0xff]
    %v100 = vld [vmem:[#allocation5 + $0x68] sm:$0xff]
    %v101 = vld [vmem:[#allocation5 + $0x78] sm:$0xff]
    %v102 = vld [vmem:[#allocation5 + $0x88] sm:$0xff]
    %v103 = vld [vmem:[#allocation5 + $0x98] sm:$0xff]
    %v104 = vld [vmem:[#allocation5 + $0xa8] sm:$0xff]
    %v105 = vld [vmem:[#allocation5 + $0xb8] sm:$0xff]
    %v106 = vld [vmem:[#allocation5 + $0xc8] sm:$0xff]
    %v107 = vld [vmem:[#allocation5 + $0xd8] sm:$0xff]
    %v108 = vld [vmem:[#allocation5 + $0xe8] sm:$0xff]
    %v109 = vld [vmem:[#allocation5 + $0xf8] sm:$0xff]
    %v110 = vld [vmem:[%s4] sm:$0x1]
    %v111 = vld [vmem:[%s4 + $0x1] sm:$0x1]
    %v112 = vld [vmem:[%s4 + $0x2] sm:$0x1]
    %v113 = vld [vmem:[%s4 + $0x3] sm:$0x1]
    %v115 = vlaneseq
    %v116 = vshrl.u32 %v115, 7
    %v117 = vsub.s32 0, %v116
    %v118 = vrot.slane %v110, %v117
    %120 = vmatprep.subr.mxu0 0.0
    %121 = vmatpush1.msra.mxu0 %v93
    %122 = vmatprep.subr.mxu0 0.0
    %123 = vmatpush1.msra.mxu0 %v92
    %124 = vmatprep.subr.mxu0 0.0
    %125 = vmatpush1.msra.mxu0 %v91
    %126 = vmatprep.subr.mxu0 0.0
    %127 = vmatpush1.msra.mxu0 %v90
    %128 = vmatprep.subr.mxu0 0.0
    %129 = vmatpush1.msra.mxu0 %v89
    %130 = vmatprep.subr.mxu0 0.0
    %131 = vmatpush1.msra.mxu0 %v88
    %132 = vmatprep.subr.mxu0 0.0
    %133 = vmatpush1.msra.mxu0 %v87
    %134 = vmatprep.subr.mxu0 0.0
    %135 = vmatpush1.msra.mxu0 %v86
    %136 = vmatprep.subr.mxu0 0.0
    %137 = vmatpush1.msra.mxu0 %v85
    %138 = vmatprep.subr.mxu0 0.0
    %139 = vmatpush1.msra.mxu0 %v84
    %140 = vmatprep.subr.mxu0 0.0
    %141 = vmatpush1.msra.mxu0 %v83
    %142 = vmatprep.subr.mxu0 0.0
    %143 = vmatpush1.msra.mxu0 %v82
    %144 = vmatprep.subr.mxu0 0.0
    %145 = vmatpush1.msra.mxu0 %v81
    %146 = vmatprep.subr.mxu0 0.0
    %147 = vmatpush1.msra.mxu0 %v80
    %148 = vmatprep.subr.mxu0 0.0
    %149 = vmatpush1.msra.mxu0 %v79
    %150 = vmatprep.subr.mxu0 0.0
    %151 = vmatpush1.msra.mxu0 %v78
    %152 = vmatprep.subr.mxu0 0.0
    %153 = vmatpush2.msra.mxu0 0.0
    %154 = vmatprep.subr.mxu0 0.0
    %155 = vmatpush2.msra.mxu0 0.0
    %156 = vmatprep.subr.mxu0 0.0
    %157 = vmatpush2.msra.mxu0 0.0
    %158 = vmatprep.subr.mxu0 0.0
    %159 = vmatpush2.msra.mxu0 0.0
    %160 = vmatprep.subr.mxu0 0.0
    %161 = vmatpush2.msra.mxu0 0.0
    %162 = vmatprep.subr.mxu0 0.0
    %163 = vmatpush2.msra.mxu0 0.0
    %164 = vmatprep.subr.mxu0 0.0
    %165 = vmatpush2.msra.mxu0 0.0
    %166 = vmatprep.subr.mxu0 0.0
    %167 = vmatpush2.msra.mxu0 0.0
    %168 = vmatprep.subr.mxu0 0.0
    %169 = vmatpush2.msra.mxu0 0.0
    %170 = vmatprep.subr.mxu0 0.0
    %171 = vmatpush2.msra.mxu0 0.0
    %172 = vmatprep.subr.mxu0 0.0
    %173 = vmatpush2.msra.mxu0 0.0
    %174 = vmatprep.subr.mxu0 0.0
    %175 = vmatpush2.msra.mxu0 0.0
    %176 = vmatprep.subr.mxu0 0.0
    %177 = vmatpush2.msra.mxu0 0.0
    %178 = vmatprep.subr.mxu0 0.0
    %179 = vmatpush2.msra.mxu0 0.0
    %180 = vmatprep.subr.mxu0 0.0
    %181 = vmatpush2.msra.mxu0 0.0
    %182 = vmatprep.subr.mxu0 0.0
    %183 = vmatpush2.msra.mxu0 0.0
    %184 = vmatprep.mubr.f32.mxu0 0.0
    %185 = vmatmul.mubr.f32.gmra.mxu0 %v76
    %v186 = vpop.f32.mrf.mxu0
    %v187 = vadd.f32 %v118, %v186
    %v188 = vpop.f32.mrf.mxu0
    %189 = vmatprep.mubr.f32.mxu0 0.0
    %190 = vmatmul.mubr.f32.gmra.mxu0 %v77
    %v191 = vpop.f32.mrf.mxu0
    %v192 = vadd.f32 %v118, %v191
    %v193 = vpop.f32.mrf.mxu0
    %194 = vdwg.mxu0
    %v195 = vmax.f32 %v187, 0.0
    %v196 = vmax.f32 %v192, 0.0
    %v197 = vld [vmem:[#allocation7] sm:$0xff]
    %v198 = vld [vmem:[#allocation7 + $0x8] sm:$0xff]
    %v199 = vld [vmem:[#allocation7 + $0x10] sm:$0xff]
    %v200 = vld [vmem:[#allocation7 + $0x18] sm:$0xff]
    %v201 = vld [vmem:[#allocation7 + $0x20] sm:$0xff]
    %v202 = vld [vmem:[#allocation7 + $0x28] sm:$0xff]
    %v203 = vld [vmem:[#allocation7 + $0x30] sm:$0xff]
    %v204 = vld [vmem:[#allocation7 + $0x38] sm:$0xff]
    %v205 = vld [vmem:[#allocation7 + $0x40] sm:$0xff]
    %v206 = vld [vmem:[#allocation7 + $0x48] sm:$0xff]
    %v207 = vld [vmem:[#allocation7 + $0x50] sm:$0xff]
    %v208 = vld [vmem:[#allocation7 + $0x58] sm:$0xff]
    %v209 = vld [vmem:[#allocation7 + $0x60] sm:$0xff]
    %v210 = vld [vmem:[#allocation7 + $0x68] sm:$0xff]
    %v211 = vld [vmem:[#allocation7 + $0x70] sm:$0xff]
    %v212 = vld [vmem:[#allocation7 + $0x78] sm:$0xff]
    %v214 = vlaneseq
    %v215 = vshrl.u32 %v214, 7
    %v216 = vsub.s32 0, %v215
    %v217 = vrot.slane %v111, %v216
    %219 = vmatprep.subr.mxu0 0.0
    %220 = vmatpush1.msra.mxu0 %v212
    %221 = vmatprep.subr.mxu0 0.0
    %222 = vmatpush1.msra.mxu0 %v211
    %223 = vmatprep.subr.mxu0 0.0
    %224 = vmatpush1.msra.mxu0 %v210
    %225 = vmatprep.subr.mxu0 0.0
    %226 = vmatpush1.msra.mxu0 %v209
    %227 = vmatprep.subr.mxu0 0.0
    %228 = vmatpush1.msra.mxu0 %v208
    %229 = vmatprep.subr.mxu0 0.0
    %230 = vmatpush1.msra.mxu0 %v207
    %231 = vmatprep.subr.mxu0 0.0
    %232 = vmatpush1.msra.mxu0 %v206
    %233 = vmatprep.subr.mxu0 0.0
    %234 = vmatpush1.msra.mxu0 %v205
    %235 = vmatprep.subr.mxu0 0.0
    %236 = vmatpush1.msra.mxu0 %v204
    %237 = vmatprep.subr.mxu0 0.0
    %238 = vmatpush1.msra.mxu0 %v203
    %239 = vmatprep.subr.mxu0 0.0
    %240 = vmatpush1.msra.mxu0 %v202
    %241 = vmatprep.subr.mxu0 0.0
    %242 = vmatpush1.msra.mxu0 %v201
    %243 = vmatprep.subr.mxu0 0.0
    %244 = vmatpush1.msra.mxu0 %v200
    %245 = vmatprep.subr.mxu0 0.0
    %246 = vmatpush1.msra.mxu0 %v199
    %247 = vmatprep.subr.mxu0 0.0
    %248 = vmatpush1.msra.mxu0 %v198
    %249 = vmatprep.subr.mxu0 0.0
    %250 = vmatpush1.msra.mxu0 %v197
    %251 = vmatprep.subr.mxu0 0.0
    %252 = vmatpush2.msra.mxu0 0.0
    %253 = vmatprep.subr.mxu0 0.0
    %254 = vmatpush2.msra.mxu0 0.0
    %255 = vmatprep.subr.mxu0 0.0
    %256 = vmatpush2.msra.mxu0 0.0
    %257 = vmatprep.subr.mxu0 0.0
    %258 = vmatpush2.msra.mxu0 0.0
    %259 = vmatprep.subr.mxu0 0.0
    %260 = vmatpush2.msra.mxu0 0.0
    %261 = vmatprep.subr.mxu0 0.0
    %262 = vmatpush2.msra.mxu0 0.0
    %263 = vmatprep.subr.mxu0 0.0
    %264 = vmatpush2.msra.mxu0 0.0
    %265 = vmatprep.subr.mxu0 0.0
    %266 = vmatpush2.msra.mxu0 0.0
    %267 = vmatprep.subr.mxu0 0.0
    %268 = vmatpush2.msra.mxu0 0.0
    %269 = vmatprep.subr.mxu0 0.0
    %270 = vmatpush2.msra.mxu0 0.0
    %271 = vmatprep.subr.mxu0 0.0
    %272 = vmatpush2.msra.mxu0 0.0
    %273 = vmatprep.subr.mxu0 0.0
    %274 = vmatpush2.msra.mxu0 0.0
    %275 = vmatprep.subr.mxu0 0.0
    %276 = vmatpush2.msra.mxu0 0.0
    %277 = vmatprep.subr.mxu0 0.0
    %278 = vmatpush2.msra.mxu0 0.0
    %279 = vmatprep.subr.mxu0 0.0
    %280 = vmatpush2.msra.mxu0 0.0
    %281 = vmatprep.subr.mxu0 0.0
    %282 = vmatpush2.msra.mxu0 0.0
    %283 = vmatprep.mubr.f32.mxu0 0.0
    %284 = vmatmul.mubr.f32.gmra.mxu0 %v195
    %v285 = vpop.f32.mrf.mxu0
    %v286 = vadd.f32 %v217, %v285
    %v287 = vpop.f32.mrf.mxu0
    %288 = vmatprep.mubr.f32.mxu0 0.0
    %289 = vmatmul.mubr.f32.gmra.mxu0 %v196
    %v290 = vpop.f32.mrf.mxu0
    %v291 = vadd.f32 %v217, %v290
    %v292 = vpop.f32.mrf.mxu0
    %293 = vdwg.mxu0
    %v294 = vadd.f32 %v286, %v76
    %v295 = vadd.f32 %v291, %v77
    %v297 = vlaneseq
    %v298 = vshrl.u32 %v297, 7
    %v299 = vsub.s32 0, %v298
    %v300 = vrot.slane %v112, %v299
    %302 = vmatprep.subr.mxu0 0.0
    %303 = vmatpush1.msra.mxu0 %v109
    %304 = vmatprep.subr.mxu0 0.0
    %305 = vmatpush1.msra.mxu0 %v108
    %306 = vmatprep.subr.mxu0 0.0
    %307 = vmatpush1.msra.mxu0 %v107
    %308 = vmatprep.subr.mxu0 0.0
    %309 = vmatpush1.msra.mxu0 %v106
    %310 = vmatprep.subr.mxu0 0.0
    %311 = vmatpush1.msra.mxu0 %v105
    %312 = vmatprep.subr.mxu0 0.0
    %313 = vmatpush1.msra.mxu0 %v104
    %314 = vmatprep.subr.mxu0 0.0
    %315 = vmatpush1.msra.mxu0 %v103
    %316 = vmatprep.subr.mxu0 0.0
    %317 = vmatpush1.msra.mxu0 %v102
    %318 = vmatprep.subr.mxu0 0.0
    %319 = vmatpush1.msra.mxu0 %v101
    %320 = vmatprep.subr.mxu0 0.0
    %321 = vmatpush1.msra.mxu0 %v100
    %322 = vmatprep.subr.mxu0 0.0
    %323 = vmatpush1.msra.mxu0 %v99
    %324 = vmatprep.subr.mxu0 0.0
    %325 = vmatpush1.msra.mxu0 %v98
    %326 = vmatprep.subr.mxu0 0.0
    %327 = vmatpush1.msra.mxu0 %v97
    %328 = vmatprep.subr.mxu0 0.0
    %329 = vmatpush1.msra.mxu0 %v96
    %330 = vmatprep.subr.mxu0 0.0
    %331 = vmatpush1.msra.mxu0 %v95
    %332 = vmatprep.subr.mxu0 0.0
    %333 = vmatpush1.msra.mxu0 %v94
    %334 = vmatprep.subr.mxu0 0.0
    %335 = vmatpush2.msra.mxu0 0.0
    %336 = vmatprep.subr.mxu0 0.0
    %337 = vmatpush2.msra.mxu0 0.0
    %338 = vmatprep.subr.mxu0 0.0
    %339 = vmatpush2.msra.mxu0 0.0
    %340 = vmatprep.subr.mxu0 0.0
    %341 = vmatpush2.msra.mxu0 0.0
    %342 = vmatprep.subr.mxu0 0.0
    %343 = vmatpush2.msra.mxu0 0.0
    %344 = vmatprep.subr.mxu0 0.0
    %345 = vmatpush2.msra.mxu0 0.0
    %346 = vmatprep.subr.mxu0 0.0
    %347 = vmatpush2.msra.mxu0 0.0
    %348 = vmatprep.subr.mxu0 0.0
    %349 = vmatpush2.msra.mxu0 0.0
    %350 = vmatprep.subr.mxu0 0.0
    %351 = vmatpush2.msra.mxu0 0.0
    %352 = vmatprep.subr.mxu0 0.0
    %353 = vmatpush2.msra.mxu0 0.0
    %354 = vmatprep.subr.mxu0 0.0
    %355 = vmatpush2.msra.mxu0 0.0
    %356 = vmatprep.subr.mxu0 0.0
    %357 = vmatpush2.msra.mxu0 0.0
    %358 = vmatprep.subr.mxu0 0.0
    %359 = vmatpush2.msra.mxu0 0.0
    %360 = vmatprep.subr.mxu0 0.0
    %361 = vmatpush2.msra.mxu0 0.0
    %362 = vmatprep.subr.mxu0 0.0
    %363 = vmatpush2.msra.mxu0 0.0
    %364 = vmatprep.subr.mxu0 0.0
    %365 = vmatpush2.msra.mxu0 0.0
    %366 = vmatprep.mubr.f32.mxu0 0.0
    %367 = vmatmul.mubr.f32.gmra.mxu0 %v294
    %v368 = vpop.f32.mrf.mxu0
    %v369 = vadd.f32 %v300, %v368
    %v370 = vpop.f32.mrf.mxu0
    %371 = vmatprep.mubr.f32.mxu0 0.0
    %372 = vmatmul.mubr.f32.gmra.mxu0 %v295
    %v373 = vpop.f32.mrf.mxu0
    %v374 = vadd.f32 %v300, %v373
    %v375 = vpop.f32.mrf.mxu0
    %376 = vdwg.mxu0
    %v377 = vld [vmem:[#allocation8] sm:$0xff]
    %v378 = vld [vmem:[#allocation8 + $0x8] sm:$0xff]
    %v379 = vld [vmem:[#allocation8 + $0x10] sm:$0xff]
    %v380 = vld [vmem:[#allocation8 + $0x18] sm:$0xff]
    %v381 = vld [vmem:[#allocation8 + $0x20] sm:$0xff]
    %v382 = vld [vmem:[#allocation8 + $0x28] sm:$0xff]
    %v383 = vld [vmem:[#allocation8 + $0x30] sm:$0xff]
    %v384 = vld [vmem:[#allocation8 + $0x38] sm:$0xff]
    %v385 = vld [vmem:[#allocation8 + $0x40] sm:$0xff]
    %v386 = vld [vmem:[#allocation8 + $0x48] sm:$0xff]
    %v387 = vld [vmem:[#allocation8 + $0x50] sm:$0xff]
    %v388 = vld [vmem:[#allocation8 + $0x58] sm:$0xff]
    %v389 = vld [vmem:[#allocation8 + $0x60] sm:$0xff]
    %v390 = vld [vmem:[#allocation8 + $0x68] sm:$0xff]
    %v391 = vld [vmem:[#allocation8 + $0x70] sm:$0xff]
    %v392 = vld [vmem:[#allocation8 + $0x78] sm:$0xff]
    %v394 = vlaneseq
    %v395 = vshrl.u32 %v394, 7
    %v396 = vsub.s32 0, %v395
    %v397 = vrot.slane %v113, %v396
    %399 = vmatprep.subr.mxu0 0.0
    %400 = vmatpush1.msra.mxu0 %v392
    %401 = vmatprep.subr.mxu0 0.0
    %402 = vmatpush1.msra.mxu0 %v391
    %403 = vmatprep.subr.mxu0 0.0
    %404 = vmatpush1.msra.mxu0 %v390
    %405 = vmatprep.subr.mxu0 0.0
    %406 = vmatpush1.msra.mxu0 %v389
    %407 = vmatprep.subr.mxu0 0.0
    %408 = vmatpush1.msra.mxu0 %v388
    %409 = vmatprep.subr.mxu0 0.0
    %410 = vmatpush1.msra.mxu0 %v387
    %411 = vmatprep.subr.mxu0 0.0
    %412 = vmatpush1.msra.mxu0 %v386
    %413 = vmatprep.subr.mxu0 0.0
    %414 = vmatpush1.msra.mxu0 %v385
    %415 = vmatprep.subr.mxu0 0.0
    %416 = vmatpush1.msra.mxu0 %v384
    %417 = vmatprep.subr.mxu0 0.0
    %418 = vmatpush1.msra.mxu0 %v383
    %419 = vmatprep.subr.mxu0 0.0
    %420 = vmatpush1.msra.mxu0 %v382
    %421 = vmatprep.subr.mxu0 0.0
    %422 = vmatpush1.msra.mxu0 %v381
    %423 = vmatprep.subr.mxu0 0.0
    %424 = vmatpush1.msra.mxu0 %v380
    %425 = vmatprep.subr.mxu0 0.0
    %426 = vmatpush1.msra.mxu0 %v379
    %427 = vmatprep.subr.mxu0 0.0
    %428 = vmatpush1.msra.mxu0 %v378
    %429 = vmatprep.subr.mxu0 0.0
    %430 = vmatpush1.msra.mxu0 %v377
    %431 = vmatprep.subr.mxu0 0.0
    %432 = vmatpush2.msra.mxu0 0.0
    %433 = vmatprep.subr.mxu0 0.0
    %434 = vmatpush2.msra.mxu0 0.0
    %435 = vmatprep.subr.mxu0 0.0
    %436 = vmatpush2.msra.mxu0 0.0
    %437 = vmatprep.subr.mxu0 0.0
    %438 = vmatpush2.msra.mxu0 0.0
    %439 = vmatprep.subr.mxu0 0.0
    %440 = vmatpush2.msra.mxu0 0.0
    %441 = vmatprep.subr.mxu0 0.0
    %442 = vmatpush2.msra.mxu0 0.0
    %443 = vmatprep.subr.mxu0 0.0
    %444 = vmatpush2.msra.mxu0 0.0
    %445 = vmatprep.subr.mxu0 0.0
    %446 = vmatpush2.msra.mxu0 0.0
    %447 = vmatprep.subr.mxu0 0.0
    %448 = vmatpush2.msra.mxu0 0.0
    %449 = vmatprep.subr.mxu0 0.0
    %450 = vmatpush2.msra.mxu0 0.0
    %451 = vmatprep.subr.mxu0 0.0
    %452 = vmatpush2.msra.mxu0 0.0
    %453 = vmatprep.subr.mxu0 0.0
    %454 = vmatpush2.msra.mxu0 0.0
    %455 = vmatprep.subr.mxu0 0.0
    %456 = vmatpush2.msra.mxu0 0.0
    %457 = vmatprep.subr.mxu0 0.0
    %458 = vmatpush2.msra.mxu0 0.0
    %459 = vmatprep.subr.mxu0 0.0
    %460 = vmatpush2.msra.mxu0 0.0
    %461 = vmatprep.subr.mxu0 0.0
    %462 = vmatpush2.msra.mxu0 0.0
    %463 = vmatprep.mubr.f32.mxu0 0.0
    %464 = vmatmul.mubr.f32.gmra.mxu0 %v369
    %v465 = vpop.f32.mrf.mxu0
    %v466 = vadd.f32 %v397, %v465
    %v467 = vpop.f32.mrf.mxu0
    %468 = vmatprep.mubr.f32.mxu0 0.0
    %469 = vmatmul.mubr.f32.gmra.mxu0 %v374
    %v470 = vpop.f32.mrf.mxu0
    %v471 = vadd.f32 %v397, %v470
    %v472 = vpop.f32.mrf.mxu0
    %473 = vdwg.mxu0
    %474 = vst [vmem:[#allocation10] sm:$0xff] %v369
    %475 = vst [vmem:[#allocation10 + $0x8] sm:$0xff] %v466
    %476 = vst [vmem:[#allocation10 + $0x10] sm:$0xff] %v374
    %477 = vst [vmem:[#allocation10 + $0x18] sm:$0xff] %v471
    // Predicated region
    $region38: #{tpu_custom_call.1} parent=1 // pred_check
      _
    $region39: #{tpu_custom_call.1} parent=1 // pred_check_branch
      %479 = sbr.rel (0) target = $region41
    $region40: #{tpu_custom_call.1} parent=1 // pred_region
      %s481 = ssub.s32 512, 512
      %482 = vsyncadd [#allocation4], %s481
      %s483 = sshll.u32 [#allocation10], 4
      %s484 = int_to_ptr.vmem [resolvable:$true] %s483
      %489 = dma.vmem_to_hbm [thread:$0]  %s484, 512, %s5, [#allocation4], 256, 256, 16
    $region41: #{tpu_custom_call.1} parent=1 // pred_fallthru
      _
    // Predicated region
    $region42: #{tpu_custom_call.1} parent=1 // pred_check
      _
    $region43: #{tpu_custom_call.1} parent=1 // pred_check_branch
      %491 = sbr.rel (0) target = $region45
    $region44: #{tpu_custom_call.1} parent=1 // pred_region
      %492 = dma.done [#allocation4], 512
    $region45: #{tpu_custom_call.1} parent=1 // pred_fallthru
      _
    %493 = vsyncpa [#allocation3], 1
    %494 = vsyncpa [#allocation6], 1
    %495 = vsyncpa [#allocation9], 1
    %496 = vsyncpa [#allocation4], 1

</llo_original>
